<compile_context>
chip_gen: v6e
topology: v6e:2x2x1
jax: 0.10.0
libtpu: 0.0.40
codegen_flags: <defaults>
</compile_context>

<pallas_src>
import functools
import math

import jax
import jax.numpy as jnp
from jax.experimental import pallas as pl
from jax.experimental.pallas import tpu as pltpu


def _sublane_pack(dtype):
    # f32 -> 8 rows per native tile, bf16 -> 16, int8/fp8 -> 32.
    return {4: 8, 2: 16, 1: 32}.get(jnp.dtype(dtype).itemsize, 8)


def _round_up(x, m):
    return ((x + m - 1) // m) * m


def _cdiv(a, b):
    return -(-a // b)


@functools.lru_cache(maxsize=None)
def _vmem_params():
    """(double-buffered block budget bytes, scoped vmem_limit bytes), per chip gen."""
    budget, limit = 16 << 20, 32 << 20          # safe on v5e/v6e/v7x if detection fails
    try:
        info = pltpu.get_tpu_info()
        vmem = None
        for name in ("vmem_capacity_bytes", "vmem_bytes", "vmem_size_bytes",
                     "vmem_capacity"):
            v = getattr(info, name, None)
            if isinstance(v, int) and v > 0:
                vmem = v
                break
        if vmem is not None:
            if vmem <= (64 << 20):              # v7x-class: 64 MiB VMEM, 3.2 TB/s HBM
                budget, limit = 20 << 20, 32 << 20
            else:                               # v5e / v6e: 128 MiB physical VMEM
                budget, limit = 16 << 20, 64 << 20
    except Exception:
        pass
    return budget, limit


# --------------------------------------------------------------------------
# Kernels
# --------------------------------------------------------------------------
def _glu_split_kernel(out_ref, gate_ref, o_ref):
    """Halves delivered as separate tiles by BlockSpec (no in-kernel shuffle)."""
    a = out_ref[...].astype(jnp.float32)
    g = gate_ref[...].astype(jnp.float32)
    sig = 1.0 / (1.0 + jnp.exp(-g))             # exact sigmoid (mem-bound kernel)
    o_ref[...] = (a * sig).astype(o_ref.dtype)


def _glu_fused_kernel(x_ref, o_ref, *, half):
    """Single contiguous block; static slice (pure vreg selection when 128-aligned)."""
    x = x_ref[...].astype(jnp.float32)
    a = x[:, :half]
    g = x[:, half:]
    sig = 1.0 / (1.0 + jnp.exp(-g))
    o_ref[...] = (a * sig).astype(o_ref.dtype)


# --------------------------------------------------------------------------
# Tile selection (row tile for the 2-D path)
# --------------------------------------------------------------------------
def _pick_tm(M, width, itemsize, pack, budget):
    """Row tile; double-buffered footprint ~= 6 * tm * width * itemsize bytes."""
    if M <= pack:
        return M
    tm = budget // max(1, 6 * width * itemsize)
    tm = max(pack, min(tm, 8192))
    tm = (tm // pack) * pack
    # Keep a few grid steps so DMA/compute pipeline and both v7x cores get work.
    if _cdiv(M, tm) < 4 and M > 4 * pack:
        tm = max(pack, _round_up(_cdiv(M, 4), pack))
    s = _cdiv(M, tm)
    if 2 <= s <= 8 and s % 2 == 1:              # avoid 3/5/7-step grids (megacore tail)
        tm2 = max(pack, (_cdiv(M, s + 1) // pack) * pack)
        if _cdiv(M, tm2) % 2 == 0:
            tm = tm2
    if tm >= M:
        tm = M                                   # full dim: always a legal block dim
    return tm


# --------------------------------------------------------------------------
# Path 1: split along the last axis.  x2d: (M, 2*half) -> (M, half)
# --------------------------------------------------------------------------
def _glu_lastdim(x2d, half, itemsize, pack, budget, limit):
    M, C = x2d.shape
    aligned = (half % 128 == 0)
    narrow = (half * itemsize <= 1024)          # fused contiguous DMA beats 2 strided streams

    if (not aligned) or narrow:
        tm = _pick_tm(M, half, itemsize, pack, budget)
        grid = (pl.cdiv(M, tm),)
        kernel = functools.partial(_glu_fused_kernel, half=half)
        return pl.pallas_call(
            kernel,
            out_shape=jax.ShapeDtypeStruct((M, half), x2d.dtype),
            grid_spec=pltpu.PrefetchScalarGridSpec(
                num_scalar_prefetch=0,
                grid=grid,
                in_specs=[pl.BlockSpec((tm, C), lambda i: (i, 0))],
                out_specs=pl.BlockSpec((tm, half), lambda i: (i, 0)),
            ),
            compiler_params=pltpu.CompilerParams(
                dimension_semantics=("parallel",),
                vmem_limit_bytes=limit,
            ),
        )(x2d)

    # Wide, lane-aligned halves: BlockSpec delivers out/gate as separate tiles.
    # Column (lane) tiling keeps the minimum block inside the budget for any half.
    tn = half
    if 6 * pack * half * itemsize > budget:
        tn = budget // max(1, 6 * pack * itemsize)
        tn = max(128, (tn // 128) * 128)
        tn = min(tn, half)
        while half % tn:                         # tn must divide half (half % 128 == 0)
            tn -= 128
    tm = _pick_tm(M, tn, itemsize, pack, budget)
    col_blocks = half // tn
    grid = (pl.cdiv(M, tm), col_blocks)
    return pl.pallas_call(
        _glu_split_kernel,
        out_shape=jax.ShapeDtypeStruct((M, half), x2d.dtype),
        grid_spec=pltpu.PrefetchScalarGridSpec(
            num_scalar_prefetch=0,
            grid=grid,
            in_specs=[
                pl.BlockSpec((tm, tn), lambda i, j: (i, j)),               # out half
                pl.BlockSpec((tm, tn), lambda i, j: (i, col_blocks + j)),  # gate half
            ],
            out_specs=pl.BlockSpec((tm, tn), lambda i, j: (i, j)),
        ),
        compiler_params=pltpu.CompilerParams(
            dimension_semantics=("parallel", "parallel"),
            vmem_limit_bytes=limit,
        ),
    )(x2d, x2d)


# --------------------------------------------------------------------------
# Path 2: split along an inner axis.  x3: (L, 2*half, R) -> (L, half, R)
# The chunk is a sublane block-offset in the index_map; the trailing axis stays
# on lanes so loads AND stores are lane-dense and no transpose is ever needed.
# --------------------------------------------------------------------------
def _glu_middim(x3, half, itemsize, pack, budget, limit):
    L, C, R = x3.shape

    # Lane (trailing) tile.
    if R <= 128:
        tr = R
    else:
        tr = budget // max(1, 6 * half * itemsize)
        tr = max(128, (tr // 128) * 128)
        tr = min(tr, 8192)
        if tr >= R:
            tr = R                               # full trailing dim: always legal

    # Sublane (channel) tile: split only when one (pack, half, tr) block would
    # already blow the budget (very large channel counts).
    th = half
    if 6 * half * tr * itemsize > budget:
        th = budget // max(1, 6 * tr * itemsize)
        th = max(pack, (th // pack) * pack)
        th = min(th, half)
        while half % th:                         # th must divide half (half % pack == 0)
            th -= pack

    # Leading tile — cdiv grid with padded last block (no divisibility loop).
    tl = budget // max(1, 6 * th * tr * itemsize)
    tl = max(1, min(tl, L))

    # Keep a handful of grid steps so the pipeline (and both v7x cores) stay busy.
    if _cdiv(L, tl) * (half // th) * _cdiv(R, tr) < 4:
        if L >= 4:
            tl = _cdiv(L, 4)
        if _cdiv(L, tl) * (half // th) * _cdiv(R, tr) < 4 and R > 4 * 128:
            tr2 = max(128, _round_up(_cdiv(R, 4), 128))
            tr = R if tr2 >= R else tr2

    hb = half // th
    grid = (_cdiv(L, tl), hb, _cdiv(R, tr))
    return pl.pallas_call(
        _glu_split_kernel,
        out_shape=jax.ShapeDtypeStruct((L, half, R), x3.dtype),
        grid_spec=pltpu.PrefetchScalarGridSpec(
            num_scalar_prefetch=0,
            grid=grid,
            in_specs=[
                pl.BlockSpec((tl, th, tr), lambda l, h, r: (l, h, r)),       # out half
                pl.BlockSpec((tl, th, tr), lambda l, h, r: (l, hb + h, r)),  # gate half
            ],
            out_specs=pl.BlockSpec((tl, th, tr), lambda l, h, r: (l, h, r)),
        ),
        compiler_params=pltpu.CompilerParams(
            dimension_semantics=("parallel", "parallel", "parallel"),
            vmem_limit_bytes=limit,
        ),
    )(x3, x3)


# --------------------------------------------------------------------------
# Public wrapper (matches torch: out, gate = x.chunk(2, dim); out * gate.sigmoid())
# --------------------------------------------------------------------------
def glu(x, dim):
    ndim = x.ndim
    dim = dim % ndim
    C = x.shape[dim]
    assert C % 2 == 0, "GLU split dim must be even"
    half = C // 2

    itemsize = jnp.dtype(x.dtype).itemsize
    pack = _sublane_pack(x.dtype)
    budget, limit = _vmem_params()

    lead = x.shape[:dim]
    trail = x.shape[dim + 1:]
    L = math.prod(lead) if lead else 1
    R = math.prod(trail) if trail else 1
    out_shape = lead + (half,) + trail

    if R == 1:
        # Split axis is (effectively) the last axis.
        y2d = _glu_lastdim(x.reshape(L, C), half, itemsize, pack, budget, limit)
        return y2d.reshape(out_shape)

    if half % pack == 0:
        # Inner-axis split: keep the wide trailing axes on lanes (no transposes).
        y3 = _glu_middim(x.reshape(L, C, R), half, itemsize, pack, budget, limit)
        return y3.reshape(out_shape)

    # Rare shapes (half not sublane-aligned on an inner split): generic fallback
    # via moveaxis (pays two transposes, correctness first).
    xm = jnp.moveaxis(x, dim, -1)
    M = math.prod(xm.shape[:-1]) if xm.shape[:-1] else 1
    y2d = _glu_lastdim(xm.reshape(M, C), half, itemsize, pack, budget, limit)
    y = y2d.reshape(xm.shape[:-1] + (half,))
    return jnp.moveaxis(y, -1, dim)


def _glu_ref(x, dim):
    out, gate = jnp.split(x, 2, axis=dim)
    return out * jax.nn.sigmoid(gate)


if __name__ == "__main__":
    key = jax.random.PRNGKey(0)
    k1, k2, k3, k4, k5 = jax.random.split(key, 5)
    TOL = dict(atol=1e-5, rtol=1e-5)   # exact sigmoid -> tight tolerance

    # 1) FCPE transformer-style: split along last dim, narrow hidden (fused path)
    x1 = jax.random.normal(k1, (2, 8, 64), dtype=jnp.float32)
    y1 = jax.block_until_ready(glu(x1, -1))
    assert y1.shape == (2, 8, 32), y1.shape
    assert jnp.allclose(y1, _glu_ref(x1, -1), **TOL), "mismatch (last-dim, fused narrow)"

    # 2) 128-aligned but still narrow half -> fused contiguous-DMA path
    x2 = jax.random.normal(k2, (2, 8, 256), dtype=jnp.float32)
    y2 = jax.block_until_ready(glu(x2, -1))
    assert y2.shape == (2, 8, 128), y2.shape
    assert jnp.allclose(y2, _glu_ref(x2, -1), **TOL), "mismatch (last-dim, fused aligned)"

    # 3) Wide aligned half -> split-BlockSpec (two-stream) path
    x3 = jax.random.normal(k3, (2, 8, 1024), dtype=jnp.float32)
    y3 = jax.block_until_ready(glu(x3, -1))
    assert y3.shape == (2, 8, 512), y3.shape
    assert jnp.allclose(y3, _glu_ref(x3, -1), **TOL), "mismatch (last-dim, split)"

    # 4) FCPE conv-module style: GLU(dim=1) on (B, 2C, T) -> no transposes
    x4 = jax.random.normal(k4, (2, 16, 8), dtype=jnp.float32)
    y4 = jax.block_until_ready(glu(x4, 1))
    assert y4.shape == (2, 8, 8), y4.shape
    assert jnp.allclose(y4, _glu_ref(x4, 1), **TOL), "mismatch (inner-dim)"

    # 5) Awkward odd shapes (inner split, half not sublane-aligned) -> fallback path
    x5 = jax.random.normal(k5, (3, 10, 12), dtype=jnp.float32)
    y5 = jax.block_until_ready(glu(x5, 1))
    assert y5.shape == (3, 5, 12), y5.shape
    assert jnp.allclose(y5, _glu_ref(x5, 1), **TOL), "mismatch (fallback)"

    print("KERNEL_OK")
</pallas_src>

<mosaic_0001>
module attributes {stable_mosaic.version = 11 : i64} {
  func.func @_glu_fused_kernel(%arg0: i32, %arg1: memref<16x64xf32, #tpu.memory_space<vmem>>, %arg2: memref<16x32xf32, #tpu.memory_space<vmem>>) attributes {dimension_semantics = [#tpu.dimension_semantics<parallel>], iteration_bounds = array<i64: 1>, scalar_prefetch = 0 : i64, scratch_operands = 0 : i64, tpu.core_type = #tpu.core_type<tc>, window_params = [{transform_indices = @transform_0, window_bounds = array<i64: 16, 64>}, {transform_indices = @transform_1, window_bounds = array<i64: 16, 32>}]} {
    %c0 = arith.constant 0 : index
    %c0_0 = arith.constant 0 : index
    %0 = vector.load %arg1[%c0, %c0_0] : memref<16x64xf32, #tpu.memory_space<vmem>>, vector<16x64xf32>
    %1 = vector.extract_strided_slice %0 {offsets = [0, 0], sizes = [16, 32], strides = [1, 1]} : vector<16x64xf32> to vector<16x32xf32>
    %2 = vector.extract_strided_slice %0 {offsets = [0, 32], sizes = [16, 32], strides = [1, 1]} : vector<16x64xf32> to vector<16x32xf32>
    %cst = arith.constant 0.000000e+00 : f32
    %3 = vector.broadcast %cst : f32 to vector<16x32xf32>
    %4 = arith.subf %3, %2 : vector<16x32xf32>
    %5 = math.exp %4 : vector<16x32xf32>
    %cst_1 = arith.constant 1.000000e+00 : f32
    %6 = vector.broadcast %cst_1 : f32 to vector<16x32xf32>
    %7 = arith.addf %6, %5 : vector<16x32xf32>
    %cst_2 = arith.constant 1.000000e+00 : f32
    %8 = vector.broadcast %cst_2 : f32 to vector<16x32xf32>
    %9 = arith.divf %8, %7 : vector<16x32xf32>
    %10 = arith.mulf %1, %9 : vector<16x32xf32>
    %c0_3 = arith.constant 0 : index
    %c0_4 = arith.constant 0 : index
    %11 = vector.load %arg2[%c0_3, %c0_4] : memref<16x32xf32, #tpu.memory_space<vmem>>, vector<16x32xf32>
    tpu.vector_store %arg2[%c0_3, %c0_4], %10 {strides = array<i32>} : memref<16x32xf32, #tpu.memory_space<vmem>>, vector<16x32xf32>,
    return
  }
  func.func @transform_0(%arg0: i32) -> (i32, i32) {
    %c0_i32 = arith.constant 0 : i32
    %c0_i32_0 = arith.constant 0 : i32
    return %arg0, %c0_i32 : i32, i32
  }
  func.func @transform_1(%arg0: i32) -> (i32, i32) {
    %c0_i32 = arith.constant 0 : i32
    %c0_i32_0 = arith.constant 0 : i32
    return %arg0, %c0_i32 : i32, i32
  }
}

</mosaic_0001>

<llo_original>
// kernel: tpu_custom_call.1
$region0: #{tpu_custom_call.1}
  #allocation0 [shape = 'u32[]', space=smem, size = 0x4, offset = 0x4, fixed_abs, tag = 'smem constant byte address 0x4 - core index']
  #allocation1 [shape = 'u32[144,128]{1,0:T(1,128)}', space=vmem, size = 0x12000, scoped, tag = 'internal scratch']
  %s0 = inlined_call_operand.hbm [shape: f32[16,64], index: 0, kind: input, shape index: {}]
  %s1 = inlined_call_operand.hbm [shape: f32[16,32], index: 1, kind: output, shape index: {}]
  %s2 = sld [smem:[#allocation0]]
  $region18: #{tpu_custom_call.1} parent=0
    _
  %s4 = ssub.s32 1, %s2
  %s5 = scalar_select 0, %s4, %s2
  $region1: #{tpu_custom_call.1} parent=0
    #allocation2 [shape = 'u8[8192]{0}', space=vmem, size = 0x2000, scoped, tag = 'input window, operand 0, single buffered']
    #allocation3 [shape = 's32[1]{0}', space=sflag, size = 0x4, scoped, tag = 'scoped memory for tpu_custom_call.1']
    #allocation4 [shape = 's32[1]{0}', space=sflag, size = 0x4, scoped, tag = 'scoped memory for tpu_custom_call.1']
    #allocation5 [shape = 'u8[8192]{0}', space=vmem, size = 0x2000, scoped, tag = 'output window, operand 0, single buffered']
    %6 = vsyncpa [#allocation3], 0
    %7 = vsyncpa [#allocation4], 0
    // Predicated region
    $region2: #{tpu_custom_call.1} parent=1 // pred_check
      _
    $region3: #{tpu_custom_call.1} parent=1 // pred_check_branch
      %9 = sbr.rel (0) target = $region5
    $region4: #{tpu_custom_call.1} parent=1 // pred_region
      %s11 = ssub.s32 256, 256
      %12 = vsyncadd [#allocation3], %s11
      %s13 = sshll.u32 [#allocation2], 4
      %s14 = int_to_ptr.vmem [resolvable:$true] %s13
      %19 = dma.hbm_to_vmem [thread:$0]  %s0, 256, %s14, [#allocation3], 128, 128, 8
    $region5: #{tpu_custom_call.1} parent=1 // pred_fallthru
      _
    // Predicated region
    $region6: #{tpu_custom_call.1} parent=1 // pred_check
      _
    $region7: #{tpu_custom_call.1} parent=1 // pred_check_branch
      %21 = sbr.rel (0) target = $region9
    $region8: #{tpu_custom_call.1} parent=1 // pred_region
      %22 = dma.done [#allocation3], 256
    $region9: #{tpu_custom_call.1} parent=1 // pred_fallthru
      _
    %v23 = vld [vmem:[#allocation2] sm:$0xff]
    %v24 = vld [vmem:[#allocation2 + $0x8] sm:$0xff]
    %v25 = vsub.f32 0.0, %v23
    %v26 = vsub.f32 0.0, %v24
    %v27 = vmul.f32 %v25, 1.442695
    %v28 = vpow.pop %v27
    %v29 = vmul.f32 %v26, 1.442695
    %v30 = vpow.pop %v29
    %v31 = vadd.f32 %v28, 1.0
    %v32 = vadd.f32 %v30, 1.0
    %v33 = vrcp.pop %v31
    %v34 = vmul.f32 1.0, %v33
    %v35 = vrcp.pop %v32
    %v36 = vmul.f32 1.0, %v35
    %39 = vrot.lane.b32.xlu0 %v34, 96
    %v40 = vpop.permute.xlu0 %39
    %41 = vrot.lane.b32.xlu0 %v36, 96
    %v42 = vpop.permute.xlu0 %41
    %v45 = vmul.f32 %v23, %v40
    %v46 = vmul.f32 %v24, %v42
    %vm47 = vcmask 261120
    %48 = vst.msk [vmem:[#allocation5] sm:$0xff] %vm47, %v45
    %49 = vst.msk [vmem:[#allocation5 + $0x8] sm:$0xff] %vm47, %v46
    // Predicated region
    $region10: #{tpu_custom_call.1} parent=1 // pred_check
      _
    $region11: #{tpu_custom_call.1} parent=1 // pred_check_branch
      %51 = sbr.rel (0) target = $region13
    $region12: #{tpu_custom_call.1} parent=1 // pred_region
      %s53 = ssub.s32 256, 256
      %54 = vsyncadd [#allocation4], %s53
      %s55 = sshll.u32 [#allocation5], 4
      %s56 = int_to_ptr.vmem [resolvable:$true] %s55
      %61 = dma.vmem_to_hbm [thread:$0]  %s56, 256, %s1, [#allocation4], 128, 128, 8
    $region13: #{tpu_custom_call.1} parent=1 // pred_fallthru
      _
    // Predicated region
    $region14: #{tpu_custom_call.1} parent=1 // pred_check
      _
    $region15: #{tpu_custom_call.1} parent=1 // pred_check_branch
      %63 = sbr.rel (0) target = $region17
    $region16: #{tpu_custom_call.1} parent=1 // pred_region
      %64 = dma.done [#allocation4], 256
    $region17: #{tpu_custom_call.1} parent=1 // pred_fallthru
      _
    %65 = vsyncpa [#allocation3], 1
    %66 = vsyncpa [#allocation4], 1

</llo_original>
